<compile_context>
chip_gen: v6e
topology: v6e:2x2x1
jax: 0.10.0
libtpu: 0.0.40
codegen_flags: <defaults>
</compile_context>

<pallas_src>
import jax
import jax.numpy as jnp
from jax.experimental import pallas as pl
from jax.experimental.pallas import tpu as pltpu


# ----------------------------------------------------------------------------
# Kernel: dense matmul + bias (normalization already folded into W', b')
# ----------------------------------------------------------------------------
def _dense_kernel(x_ref, w_ref, b_ref, o_ref):
    # x_ref: (N, K)   flattened NCHW activations
    # w_ref: (K, D)   normalization-folded dense weights
    # b_ref: (1, D)   normalization-folded dense bias
    # o_ref: (N, D)   output (full-array block; small masked vst is fine here)
    acc = jnp.dot(x_ref[...], w_ref[...], preferred_element_type=jnp.float32)
    o_ref[...] = (acc + b_ref[...]).astype(o_ref.dtype)


# ----------------------------------------------------------------------------
# One-time "init": fold (x - mean) / std into the dense layer.
#   y = ((x - mean)/std) @ W + b
#     = x @ (expand(1/std)[:, None] * W) + (expand(-mean/std) @ W + b)
# ----------------------------------------------------------------------------
def fold_normalization_into_dense(mean, std, w, b, hw):
    inv_std = (1.0 / std).astype(jnp.float32)                 # (C,)
    shift_c = (-mean.astype(jnp.float32)) * inv_std           # (C,)
    scale = jnp.repeat(inv_std, hw)                           # (K,)
    shift = jnp.repeat(shift_c, hw)                           # (K,)
    w_f32 = w.astype(jnp.float32)
    w_fold = w_f32 * scale[:, None]                           # (K, D)
    b_fold = (b.astype(jnp.float32) + shift @ w_f32).reshape(1, -1)  # (1, D)
    return w_fold, b_fold


# ----------------------------------------------------------------------------
# Jitted forward: forward(x) = model((x - mean) / std) with folded params.
# ----------------------------------------------------------------------------
@jax.jit
def normalization_forward(x, w_fold, b_fold):
    N = x.shape[0]
    K = w_fold.shape[0]
    D = w_fold.shape[1]
    x2 = x.reshape(N, K).astype(jnp.float32)                  # (N, K) lane-dense

    out = pl.pallas_call(
        _dense_kernel,
        out_shape=jax.ShapeDtypeStruct((N, D), jnp.float32),
        in_specs=[
            pl.BlockSpec(memory_space=pltpu.MemorySpace.VMEM),  # x  (N, K)
            pl.BlockSpec(memory_space=pltpu.MemorySpace.VMEM),  # W' (K, D)
            pl.BlockSpec(memory_space=pltpu.MemorySpace.VMEM),  # b' (1, D)
        ],
        out_specs=pl.BlockSpec(memory_space=pltpu.MemorySpace.VMEM),
    )(x2, w_fold, b_fold)

    return out.astype(x.dtype)


if __name__ == "__main__":
    key = jax.random.PRNGKey(0)
    kx, kw, kb = jax.random.split(key, 3)

    N, C, H, W = 2, 4, 16, 16
    D_out = 32

    x = jax.random.normal(kx, (N, C, H, W), dtype=jnp.float32)
    # Per-channel mean/std — matches PyTorch's nn.Parameter(mean/std,
    # requires_grad=False) broadcast over (1, C, 1, 1).
    mean = jnp.array([0.485, 0.456, 0.406, 0.5], dtype=jnp.float32)
    std = jnp.array([0.229, 0.224, 0.225, 0.25], dtype=jnp.float32)

    K = C * H * W
    w = (jax.random.normal(kw, (K, D_out), dtype=jnp.float32)
         / jnp.sqrt(jnp.float32(K)))
    b = jax.random.normal(kb, (D_out,), dtype=jnp.float32) * 0.01

    # --- one-time init (hoisted out of the per-forward path) ---------------
    w_fold, b_fold = fold_normalization_into_dense(mean, std, w, b, H * W)
    w_fold = jax.block_until_ready(w_fold)
    b_fold = jax.block_until_ready(b_fold)

    # --- forward ------------------------------------------------------------
    out = normalization_forward(x, w_fold, b_fold)
    out = jax.block_until_ready(out)

    # Pure-JAX reference: normalize then matmul with the ORIGINAL params.
    ref = ((x - mean.reshape(1, C, 1, 1)) / std.reshape(1, C, 1, 1)
           ).reshape(N, -1) @ w + b
    assert out.shape == (N, D_out)
    assert jnp.allclose(out, ref, atol=1e-4, rtol=1e-4)

    print("KERNEL_OK")
</pallas_src>

<mosaic_0001>
module attributes {stable_mosaic.version = 11 : i64} {
  func.func @_dense_kernel(%arg0: memref<2x1024xf32, #tpu.memory_space<vmem>>, %arg1: memref<1024x32xf32, #tpu.memory_space<vmem>>, %arg2: memref<1x32xf32, #tpu.memory_space<vmem>>, %arg3: memref<2x32xf32, #tpu.memory_space<vmem>>) attributes {dimension_semantics = [], scalar_prefetch = 0 : i64, scratch_operands = 0 : i64, tpu.core_type = #tpu.core_type<tc>} {
    %c0 = arith.constant 0 : index
    %c0_0 = arith.constant 0 : index
    %0 = vector.load %arg0[%c0, %c0_0] : memref<2x1024xf32, #tpu.memory_space<vmem>>, vector<2x1024xf32>
    %c0_1 = arith.constant 0 : index
    %c0_2 = arith.constant 0 : index
    %1 = vector.load %arg1[%c0_1, %c0_2] : memref<1024x32xf32, #tpu.memory_space<vmem>>, vector<1024x32xf32>
    %cst = arith.constant dense<0.000000e+00> : vector<2x32xf32>
    %2 = tpu.matmul %0, %1, %cst {dimension_numbers = #tpu.dot_dimension_numbers<[1], [0], [0], [1], [0, 0, 1, 1], [], []>} : vector<2x1024xf32>, vector<1024x32xf32>, vector<2x32xf32> -> vector<2x32xf32>
    %c0_3 = arith.constant 0 : index
    %c0_4 = arith.constant 0 : index
    %3 = vector.load %arg2[%c0_3, %c0_4] : memref<1x32xf32, #tpu.memory_space<vmem>>, vector<1x32xf32>
    %4 = vector.broadcast %3 : vector<1x32xf32> to vector<2x32xf32>
    %5 = arith.addf %2, %4 : vector<2x32xf32>
    %c0_5 = arith.constant 0 : index
    %c0_6 = arith.constant 0 : index
    %6 = vector.load %arg3[%c0_5, %c0_6] : memref<2x32xf32, #tpu.memory_space<vmem>>, vector<2x32xf32>
    tpu.vector_store %arg3[%c0_5, %c0_6], %5 {strides = array<i32>} : memref<2x32xf32, #tpu.memory_space<vmem>>, vector<2x32xf32>,
    return
  }
}

</mosaic_0001>

<llo_original>
// kernel: normalization_forward.1
$region0: #{normalization_forward.1}
  #allocation0 [shape = 'u32[]', space=smem, size = 0x4, offset = 0x4, fixed_abs, tag = 'smem constant byte address 0x4 - core index']
  #allocation1 [shape = 'u32[144,128]{1,0:T(1,128)}', space=vmem, size = 0x12000, scoped, tag = 'internal scratch']
  %s0 = inlined_call_operand.vmem [shape: f32[2,1024], index: 0, kind: input, shape index: {}]
  %s1 = inlined_call_operand.vmem [shape: f32[1024,32], index: 1, kind: input, shape index: {}]
  %s2 = inlined_call_operand.vmem [shape: f32[1,32], index: 2, kind: input, shape index: {}]
  %s3 = inlined_call_operand.hbm [shape: f32[2,32], index: 3, kind: output, shape index: {}]
  %s4 = sld [smem:[#allocation0]]
  $region22: #{normalization_forward.1} parent=0
    _
  %s6 = ssub.s32 1, %s4
  %s7 = scalar_select 0, %s6, %s4
  $region1: #{normalization_forward.1} parent=0
    #allocation2 [shape = 'u8[1024]{0}', space=vmem, size = 0x400, scoped, tag = 'output window, operand 0, single buffered']
    #allocation3 [shape = 's32[1]{0}', space=sflag, size = 0x4, scoped, tag = 'scoped memory for normalization_forward.1']
    %8 = vsyncpa [#allocation3], 0
    // Predicated region
    $region2: #{normalization_forward.1} parent=1 // pred_check
      _
    $region3: #{normalization_forward.1} parent=1 // pred_check_branch
      %10 = sbr.rel (0) target = $region5
    $region4: #{normalization_forward.1} parent=1 // pred_region
      _
    $region5: #{normalization_forward.1} parent=1 // pred_fallthru
      _
    // Predicated region
    $region6: #{normalization_forward.1} parent=1 // pred_check
      _
    $region7: #{normalization_forward.1} parent=1 // pred_check_branch
      %12 = sbr.rel (0) target = $region9
    $region8: #{normalization_forward.1} parent=1 // pred_region
      _
    $region9: #{normalization_forward.1} parent=1 // pred_fallthru
      _
    // Predicated region
    $region10: #{normalization_forward.1} parent=1 // pred_check
      _
    $region11: #{normalization_forward.1} parent=1 // pred_check_branch
      %14 = sbr.rel (0) target = $region13
    $region12: #{normalization_forward.1} parent=1 // pred_region
      _
    $region13: #{normalization_forward.1} parent=1 // pred_fallthru
      _
    %v15 = vld [vmem:[%s0] sm:$0xff]
    %v16 = vld [vmem:[%s0 + $0x8] sm:$0xff]
    %v17 = vld [vmem:[%s1] sm:$0xff]
    %v18 = vld [vmem:[%s1 + $0x8] sm:$0xff]
    %v19 = vld [vmem:[%s1 + $0x10] sm:$0xff]
    %v20 = vld [vmem:[%s1 + $0x18] sm:$0xff]
    %v21 = vld [vmem:[%s1 + $0x20] sm:$0xff]
    %v22 = vld [vmem:[%s1 + $0x28] sm:$0xff]
    %v23 = vld [vmem:[%s1 + $0x30] sm:$0xff]
    %v24 = vld [vmem:[%s1 + $0x38] sm:$0xff]
    %v25 = vld [vmem:[%s1 + $0x40] sm:$0xff]
    %v26 = vld [vmem:[%s1 + $0x48] sm:$0xff]
    %v27 = vld [vmem:[%s1 + $0x50] sm:$0xff]
    %v28 = vld [vmem:[%s1 + $0x58] sm:$0xff]
    %v29 = vld [vmem:[%s1 + $0x60] sm:$0xff]
    %v30 = vld [vmem:[%s1 + $0x68] sm:$0xff]
    %v31 = vld [vmem:[%s1 + $0x70] sm:$0xff]
    %v32 = vld [vmem:[%s1 + $0x78] sm:$0xff]
    %v33 = vld [vmem:[%s1 + $0x80] sm:$0xff]
    %v34 = vld [vmem:[%s1 + $0x88] sm:$0xff]
    %v35 = vld [vmem:[%s1 + $0x90] sm:$0xff]
    %v36 = vld [vmem:[%s1 + $0x98] sm:$0xff]
    %v37 = vld [vmem:[%s1 + $0xa0] sm:$0xff]
    %v38 = vld [vmem:[%s1 + $0xa8] sm:$0xff]
    %v39 = vld [vmem:[%s1 + $0xb0] sm:$0xff]
    %v40 = vld [vmem:[%s1 + $0xb8] sm:$0xff]
    %v41 = vld [vmem:[%s1 + $0xc0] sm:$0xff]
    %v42 = vld [vmem:[%s1 + $0xc8] sm:$0xff]
    %v43 = vld [vmem:[%s1 + $0xd0] sm:$0xff]
    %v44 = vld [vmem:[%s1 + $0xd8] sm:$0xff]
    %v45 = vld [vmem:[%s1 + $0xe0] sm:$0xff]
    %v46 = vld [vmem:[%s1 + $0xe8] sm:$0xff]
    %v47 = vld [vmem:[%s1 + $0xf0] sm:$0xff]
    %v48 = vld [vmem:[%s1 + $0xf8] sm:$0xff]
    %v49 = vld [vmem:[%s1 + $0x100] sm:$0xff]
    %v50 = vld [vmem:[%s1 + $0x108] sm:$0xff]
    %v51 = vld [vmem:[%s1 + $0x110] sm:$0xff]
    %v52 = vld [vmem:[%s1 + $0x118] sm:$0xff]
    %v53 = vld [vmem:[%s1 + $0x120] sm:$0xff]
    %v54 = vld [vmem:[%s1 + $0x128] sm:$0xff]
    %v55 = vld [vmem:[%s1 + $0x130] sm:$0xff]
    %v56 = vld [vmem:[%s1 + $0x138] sm:$0xff]
    %v57 = vld [vmem:[%s1 + $0x140] sm:$0xff]
    %v58 = vld [vmem:[%s1 + $0x148] sm:$0xff]
    %v59 = vld [vmem:[%s1 + $0x150] sm:$0xff]
    %v60 = vld [vmem:[%s1 + $0x158] sm:$0xff]
    %v61 = vld [vmem:[%s1 + $0x160] sm:$0xff]
    %v62 = vld [vmem:[%s1 + $0x168] sm:$0xff]
    %v63 = vld [vmem:[%s1 + $0x170] sm:$0xff]
    %v64 = vld [vmem:[%s1 + $0x178] sm:$0xff]
    %v65 = vld [vmem:[%s1 + $0x180] sm:$0xff]
    %v66 = vld [vmem:[%s1 + $0x188] sm:$0xff]
    %v67 = vld [vmem:[%s1 + $0x190] sm:$0xff]
    %v68 = vld [vmem:[%s1 + $0x198] sm:$0xff]
    %v69 = vld [vmem:[%s1 + $0x1a0] sm:$0xff]
    %v70 = vld [vmem:[%s1 + $0x1a8] sm:$0xff]
    %v71 = vld [vmem:[%s1 + $0x1b0] sm:$0xff]
    %v72 = vld [vmem:[%s1 + $0x1b8] sm:$0xff]
    %v73 = vld [vmem:[%s1 + $0x1c0] sm:$0xff]
    %v74 = vld [vmem:[%s1 + $0x1c8] sm:$0xff]
    %v75 = vld [vmem:[%s1 + $0x1d0] sm:$0xff]
    %v76 = vld [vmem:[%s1 + $0x1d8] sm:$0xff]
    %v77 = vld [vmem:[%s1 + $0x1e0] sm:$0xff]
    %v78 = vld [vmem:[%s1 + $0x1e8] sm:$0xff]
    %v79 = vld [vmem:[%s1 + $0x1f0] sm:$0xff]
    %v80 = vld [vmem:[%s1 + $0x1f8] sm:$0xff]
    %v81 = vld [vmem:[%s1 + $0x200] sm:$0xff]
    %v82 = vld [vmem:[%s1 + $0x208] sm:$0xff]
    %v83 = vld [vmem:[%s1 + $0x210] sm:$0xff]
    %v84 = vld [vmem:[%s1 + $0x218] sm:$0xff]
    %v85 = vld [vmem:[%s1 + $0x220] sm:$0xff]
    %v86 = vld [vmem:[%s1 + $0x228] sm:$0xff]
    %v87 = vld [vmem:[%s1 + $0x230] sm:$0xff]
    %v88 = vld [vmem:[%s1 + $0x238] sm:$0xff]
    %v89 = vld [vmem:[%s1 + $0x240] sm:$0xff]
    %v90 = vld [vmem:[%s1 + $0x248] sm:$0xff]
    %v91 = vld [vmem:[%s1 + $0x250] sm:$0xff]
    %v92 = vld [vmem:[%s1 + $0x258] sm:$0xff]
    %v93 = vld [vmem:[%s1 + $0x260] sm:$0xff]
    %v94 = vld [vmem:[%s1 + $0x268] sm:$0xff]
    %v95 = vld [vmem:[%s1 + $0x270] sm:$0xff]
    %v96 = vld [vmem:[%s1 + $0x278] sm:$0xff]
    %v97 = vld [vmem:[%s1 + $0x280] sm:$0xff]
    %v98 = vld [vmem:[%s1 + $0x288] sm:$0xff]
    %v99 = vld [vmem:[%s1 + $0x290] sm:$0xff]
    %v100 = vld [vmem:[%s1 + $0x298] sm:$0xff]
    %v101 = vld [vmem:[%s1 + $0x2a0] sm:$0xff]
    %v102 = vld [vmem:[%s1 + $0x2a8] sm:$0xff]
    %v103 = vld [vmem:[%s1 + $0x2b0] sm:$0xff]
    %v104 = vld [vmem:[%s1 + $0x2b8] sm:$0xff]
    %v105 = vld [vmem:[%s1 + $0x2c0] sm:$0xff]
    %v106 = vld [vmem:[%s1 + $0x2c8] sm:$0xff]
    %v107 = vld [vmem:[%s1 + $0x2d0] sm:$0xff]
    %v108 = vld [vmem:[%s1 + $0x2d8] sm:$0xff]
    %v109 = vld [vmem:[%s1 + $0x2e0] sm:$0xff]
    %v110 = vld [vmem:[%s1 + $0x2e8] sm:$0xff]
    %v111 = vld [vmem:[%s1 + $0x2f0] sm:$0xff]
    %v112 = vld [vmem:[%s1 + $0x2f8] sm:$0xff]
    %v113 = vld [vmem:[%s1 + $0x300] sm:$0xff]
    %v114 = vld [vmem:[%s1 + $0x308] sm:$0xff]
    %v115 = vld [vmem:[%s1 + $0x310] sm:$0xff]
    %v116 = vld [vmem:[%s1 + $0x318] sm:$0xff]
    %v117 = vld [vmem:[%s1 + $0x320] sm:$0xff]
    %v118 = vld [vmem:[%s1 + $0x328] sm:$0xff]
    %v119 = vld [vmem:[%s1 + $0x330] sm:$0xff]
    %v120 = vld [vmem:[%s1 + $0x338] sm:$0xff]
    %v121 = vld [vmem:[%s1 + $0x340] sm:$0xff]
    %v122 = vld [vmem:[%s1 + $0x348] sm:$0xff]
    %v123 = vld [vmem:[%s1 + $0x350] sm:$0xff]
    %v124 = vld [vmem:[%s1 + $0x358] sm:$0xff]
    %v125 = vld [vmem:[%s1 + $0x360] sm:$0xff]
    %v126 = vld [vmem:[%s1 + $0x368] sm:$0xff]
    %v127 = vld [vmem:[%s1 + $0x370] sm:$0xff]
    %v128 = vld [vmem:[%s1 + $0x378] sm:$0xff]
    %v129 = vld [vmem:[%s1 + $0x380] sm:$0xff]
    %v130 = vld [vmem:[%s1 + $0x388] sm:$0xff]
    %v131 = vld [vmem:[%s1 + $0x390] sm:$0xff]
    %v132 = vld [vmem:[%s1 + $0x398] sm:$0xff]
    %v133 = vld [vmem:[%s1 + $0x3a0] sm:$0xff]
    %v134 = vld [vmem:[%s1 + $0x3a8] sm:$0xff]
    %v135 = vld [vmem:[%s1 + $0x3b0] sm:$0xff]
    %v136 = vld [vmem:[%s1 + $0x3b8] sm:$0xff]
    %v137 = vld [vmem:[%s1 + $0x3c0] sm:$0xff]
    %v138 = vld [vmem:[%s1 + $0x3c8] sm:$0xff]
    %v139 = vld [vmem:[%s1 + $0x3d0] sm:$0xff]
    %v140 = vld [vmem:[%s1 + $0x3d8] sm:$0xff]
    %v141 = vld [vmem:[%s1 + $0x3e0] sm:$0xff]
    %v142 = vld [vmem:[%s1 + $0x3e8] sm:$0xff]
    %v143 = vld [vmem:[%s1 + $0x3f0] sm:$0xff]
    %v144 = vld [vmem:[%s1 + $0x3f8] sm:$0xff]
    %v145 = vld [vmem:[%s2] sm:$0x1]
    %v147 = vlaneseq
    %v148 = vshrl.u32 %v147, 7
    %v149 = vsub.s32 0, %v148
    %v150 = vrot.slane %v145, %v149
    %v154 = vcombine.high %v15, %v15
    %v156 = vunpack.c.l.s4 1983009808
    %v157 = vunpack.c.0.s8 %v156
    %v158 = vlaneseq
    %v159 = vshrl.u32 %v158, 7
    %v160 = vsub.s32 %v157, %v159
    %v161 = vrot.slane %v15, %v160
    %v163 = vunpack.c.l.s4 1983009808
    %v164 = vunpack.c.0.s8 %v163
    %v165 = vlaneseq
    %v166 = vshrl.u32 %v165, 7
    %v167 = vsub.s32 %v164, %v166
    %v168 = vrot.slane %v154, %v167
    %v169 = vcombine.high %v161, %v161
    %v170 = vcombine.high %v168, %v168
    %v171 = vcombine.high %v16, %v16
    %v173 = vunpack.c.l.s4 1983009808
    %v174 = vunpack.c.0.s8 %v173
    %v175 = vlaneseq
    %v176 = vshrl.u32 %v175, 7
    %v177 = vsub.s32 %v174, %v176
    %v178 = vrot.slane %v16, %v177
    %v180 = vunpack.c.l.s4 1983009808
    %v181 = vunpack.c.0.s8 %v180
    %v182 = vlaneseq
    %v183 = vshrl.u32 %v182, 7
    %v184 = vsub.s32 %v181, %v183
    %v185 = vrot.slane %v171, %v184
    %v186 = vcombine.high %v178, %v178
    %v187 = vcombine.high %v185, %v185
    %196 = vmatprep.subr.mxu0 0.0
    %197 = vmatpush1.msra.mxu0 %v32
    %198 = vmatprep.subr.mxu0 0.0
    %199 = vmatpush1.msra.mxu0 %v31
    %200 = vmatprep.subr.mxu0 0.0
    %201 = vmatpush1.msra.mxu0 %v30
    %202 = vmatprep.subr.mxu0 0.0
    %203 = vmatpush1.msra.mxu0 %v29
    %204 = vmatprep.subr.mxu0 0.0
    %205 = vmatpush1.msra.mxu0 %v28
    %206 = vmatprep.subr.mxu0 0.0
    %207 = vmatpush1.msra.mxu0 %v27
    %208 = vmatprep.subr.mxu0 0.0
    %209 = vmatpush1.msra.mxu0 %v26
    %210 = vmatprep.subr.mxu0 0.0
    %211 = vmatpush1.msra.mxu0 %v25
    %212 = vmatprep.subr.mxu0 0.0
    %213 = vmatpush1.msra.mxu0 %v24
    %214 = vmatprep.subr.mxu0 0.0
    %215 = vmatpush1.msra.mxu0 %v23
    %216 = vmatprep.subr.mxu0 0.0
    %217 = vmatpush1.msra.mxu0 %v22
    %218 = vmatprep.subr.mxu0 0.0
    %219 = vmatpush1.msra.mxu0 %v21
    %220 = vmatprep.subr.mxu0 0.0
    %221 = vmatpush1.msra.mxu0 %v20
    %222 = vmatprep.subr.mxu0 0.0
    %223 = vmatpush1.msra.mxu0 %v19
    %224 = vmatprep.subr.mxu0 0.0
    %225 = vmatpush1.msra.mxu0 %v18
    %226 = vmatprep.subr.mxu0 0.0
    %227 = vmatpush1.msra.mxu0 %v17
    %228 = vmatprep.subr.mxu0 0.0
    %229 = vmatpush2.msra.mxu0 %v48
    %230 = vmatprep.subr.mxu0 0.0
    %231 = vmatpush2.msra.mxu0 %v47
    %232 = vmatprep.subr.mxu0 0.0
    %233 = vmatpush2.msra.mxu0 %v46
    %234 = vmatprep.subr.mxu0 0.0
    %235 = vmatpush2.msra.mxu0 %v45
    %236 = vmatprep.subr.mxu0 0.0
    %237 = vmatpush2.msra.mxu0 %v44
    %238 = vmatprep.subr.mxu0 0.0
    %239 = vmatpush2.msra.mxu0 %v43
    %240 = vmatprep.subr.mxu0 0.0
    %241 = vmatpush2.msra.mxu0 %v42
    %242 = vmatprep.subr.mxu0 0.0
    %243 = vmatpush2.msra.mxu0 %v41
    %244 = vmatprep.subr.mxu0 0.0
    %245 = vmatpush2.msra.mxu0 %v40
    %246 = vmatprep.subr.mxu0 0.0
    %247 = vmatpush2.msra.mxu0 %v39
    %248 = vmatprep.subr.mxu0 0.0
    %249 = vmatpush2.msra.mxu0 %v38
    %250 = vmatprep.subr.mxu0 0.0
    %251 = vmatpush2.msra.mxu0 %v37
    %252 = vmatprep.subr.mxu0 0.0
    %253 = vmatpush2.msra.mxu0 %v36
    %254 = vmatprep.subr.mxu0 0.0
    %255 = vmatpush2.msra.mxu0 %v35
    %256 = vmatprep.subr.mxu0 0.0
    %257 = vmatpush2.msra.mxu0 %v34
    %258 = vmatprep.subr.mxu0 0.0
    %259 = vmatpush2.msra.mxu0 %v33
    %260 = vmatprep.mubr.f32.mxu0 %v169
    %261 = vmatmul.mubr.f32.gmra.mxu0 %v161
    %v262 = vpop.f32.mrf.mxu0
    %v263 = vadd.f32 %v150, %v262
    %v264 = vpop.f32.mrf.mxu0
    %265 = vdwg.mxu0
    %266 = vmatprep.subr.mxu0 0.0
    %267 = vmatpush1.msra.mxu0 %v64
    %268 = vmatprep.subr.mxu0 0.0
    %269 = vmatpush1.msra.mxu0 %v63
    %270 = vmatprep.subr.mxu0 0.0
    %271 = vmatpush1.msra.mxu0 %v62
    %272 = vmatprep.subr.mxu0 0.0
    %273 = vmatpush1.msra.mxu0 %v61
    %274 = vmatprep.subr.mxu0 0.0
    %275 = vmatpush1.msra.mxu0 %v60
    %276 = vmatprep.subr.mxu0 0.0
    %277 = vmatpush1.msra.mxu0 %v59
    %278 = vmatprep.subr.mxu0 0.0
    %279 = vmatpush1.msra.mxu0 %v58
    %280 = vmatprep.subr.mxu0 0.0
    %281 = vmatpush1.msra.mxu0 %v57
    %282 = vmatprep.subr.mxu0 0.0
    %283 = vmatpush1.msra.mxu0 %v56
    %284 = vmatprep.subr.mxu0 0.0
    %285 = vmatpush1.msra.mxu0 %v55
    %286 = vmatprep.subr.mxu0 0.0
    %287 = vmatpush1.msra.mxu0 %v54
    %288 = vmatprep.subr.mxu0 0.0
    %289 = vmatpush1.msra.mxu0 %v53
    %290 = vmatprep.subr.mxu0 0.0
    %291 = vmatpush1.msra.mxu0 %v52
    %292 = vmatprep.subr.mxu0 0.0
    %293 = vmatpush1.msra.mxu0 %v51
    %294 = vmatprep.subr.mxu0 0.0
    %295 = vmatpush1.msra.mxu0 %v50
    %296 = vmatprep.subr.mxu0 0.0
    %297 = vmatpush1.msra.mxu0 %v49
    %298 = vmatprep.subr.mxu0 0.0
    %299 = vmatpush2.msra.mxu0 %v80
    %300 = vmatprep.subr.mxu0 0.0
    %301 = vmatpush2.msra.mxu0 %v79
    %302 = vmatprep.subr.mxu0 0.0
    %303 = vmatpush2.msra.mxu0 %v78
    %304 = vmatprep.subr.mxu0 0.0
    %305 = vmatpush2.msra.mxu0 %v77
    %306 = vmatprep.subr.mxu0 0.0
    %307 = vmatpush2.msra.mxu0 %v76
    %308 = vmatprep.subr.mxu0 0.0
    %309 = vmatpush2.msra.mxu0 %v75
    %310 = vmatprep.subr.mxu0 0.0
    %311 = vmatpush2.msra.mxu0 %v74
    %312 = vmatprep.subr.mxu0 0.0
    %313 = vmatpush2.msra.mxu0 %v73
    %314 = vmatprep.subr.mxu0 0.0
    %315 = vmatpush2.msra.mxu0 %v72
    %316 = vmatprep.subr.mxu0 0.0
    %317 = vmatpush2.msra.mxu0 %v71
    %318 = vmatprep.subr.mxu0 0.0
    %319 = vmatpush2.msra.mxu0 %v70
    %320 = vmatprep.subr.mxu0 0.0
    %321 = vmatpush2.msra.mxu0 %v69
    %322 = vmatprep.subr.mxu0 0.0
    %323 = vmatpush2.msra.mxu0 %v68
    %324 = vmatprep.subr.mxu0 0.0
    %325 = vmatpush2.msra.mxu0 %v67
    %326 = vmatprep.subr.mxu0 0.0
    %327 = vmatpush2.msra.mxu0 %v66
    %328 = vmatprep.subr.mxu0 0.0
    %329 = vmatpush2.msra.mxu0 %v65
    %330 = vmatprep.mubr.f32.mxu0 %v170
    %331 = vmatmul.mubr.f32.gmra.mxu0 %v168
    %v332 = vpop.f32.mrf.mxu0
    %v333 = vadd.f32 %v263, %v332
    %v334 = vpop.f32.mrf.mxu0
    %335 = vdwg.mxu0
    %336 = vmatprep.subr.mxu0 0.0
    %337 = vmatpush1.msra.mxu0 %v96
    %338 = vmatprep.subr.mxu0 0.0
    %339 = vmatpush1.msra.mxu0 %v95
    %340 = vmatprep.subr.mxu0 0.0
    %341 = vmatpush1.msra.mxu0 %v94
    %342 = vmatprep.subr.mxu0 0.0
    %343 = vmatpush1.msra.mxu0 %v93
    %344 = vmatprep.subr.mxu0 0.0
    %345 = vmatpush1.msra.mxu0 %v92
    %346 = vmatprep.subr.mxu0 0.0
    %347 = vmatpush1.msra.mxu0 %v91
    %348 = vmatprep.subr.mxu0 0.0
    %349 = vmatpush1.msra.mxu0 %v90
    %350 = vmatprep.subr.mxu0 0.0
    %351 = vmatpush1.msra.mxu0 %v89
    %352 = vmatprep.subr.mxu0 0.0
    %353 = vmatpush1.msra.mxu0 %v88
    %354 = vmatprep.subr.mxu0 0.0
    %355 = vmatpush1.msra.mxu0 %v87
    %356 = vmatprep.subr.mxu0 0.0
    %357 = vmatpush1.msra.mxu0 %v86
    %358 = vmatprep.subr.mxu0 0.0
    %359 = vmatpush1.msra.mxu0 %v85
    %360 = vmatprep.subr.mxu0 0.0
    %361 = vmatpush1.msra.mxu0 %v84
    %362 = vmatprep.subr.mxu0 0.0
    %363 = vmatpush1.msra.mxu0 %v83
    %364 = vmatprep.subr.mxu0 0.0
    %365 = vmatpush1.msra.mxu0 %v82
    %366 = vmatprep.subr.mxu0 0.0
    %367 = vmatpush1.msra.mxu0 %v81
    %368 = vmatprep.subr.mxu0 0.0
    %369 = vmatpush2.msra.mxu0 %v112
    %370 = vmatprep.subr.mxu0 0.0
    %371 = vmatpush2.msra.mxu0 %v111
    %372 = vmatprep.subr.mxu0 0.0
    %373 = vmatpush2.msra.mxu0 %v110
    %374 = vmatprep.subr.mxu0 0.0
    %375 = vmatpush2.msra.mxu0 %v109
    %376 = vmatprep.subr.mxu0 0.0
    %377 = vmatpush2.msra.mxu0 %v108
    %378 = vmatprep.subr.mxu0 0.0
    %379 = vmatpush2.msra.mxu0 %v107
    %380 = vmatprep.subr.mxu0 0.0
    %381 = vmatpush2.msra.mxu0 %v106
    %382 = vmatprep.subr.mxu0 0.0
    %383 = vmatpush2.msra.mxu0 %v105
    %384 = vmatprep.subr.mxu0 0.0
    %385 = vmatpush2.msra.mxu0 %v104
    %386 = vmatprep.subr.mxu0 0.0
    %387 = vmatpush2.msra.mxu0 %v103
    %388 = vmatprep.subr.mxu0 0.0
    %389 = vmatpush2.msra.mxu0 %v102
    %390 = vmatprep.subr.mxu0 0.0
    %391 = vmatpush2.msra.mxu0 %v101
    %392 = vmatprep.subr.mxu0 0.0
    %393 = vmatpush2.msra.mxu0 %v100
    %394 = vmatprep.subr.mxu0 0.0
    %395 = vmatpush2.msra.mxu0 %v99
    %396 = vmatprep.subr.mxu0 0.0
    %397 = vmatpush2.msra.mxu0 %v98
    %398 = vmatprep.subr.mxu0 0.0
    %399 = vmatpush2.msra.mxu0 %v97
    %400 = vmatprep.mubr.f32.mxu0 %v186
    %401 = vmatmul.mubr.f32.gmra.mxu0 %v178
    %v402 = vpop.f32.mrf.mxu0
    %v403 = vadd.f32 %v333, %v402
    %v404 = vpop.f32.mrf.mxu0
    %405 = vdwg.mxu0
    %406 = vmatprep.subr.mxu0 0.0
    %407 = vmatpush1.msra.mxu0 %v128
    %408 = vmatprep.subr.mxu0 0.0
    %409 = vmatpush1.msra.mxu0 %v127
    %410 = vmatprep.subr.mxu0 0.0
    %411 = vmatpush1.msra.mxu0 %v126
    %412 = vmatprep.subr.mxu0 0.0
    %413 = vmatpush1.msra.mxu0 %v125
    %414 = vmatprep.subr.mxu0 0.0
    %415 = vmatpush1.msra.mxu0 %v124
    %416 = vmatprep.subr.mxu0 0.0
    %417 = vmatpush1.msra.mxu0 %v123
    %418 = vmatprep.subr.mxu0 0.0
    %419 = vmatpush1.msra.mxu0 %v122
    %420 = vmatprep.subr.mxu0 0.0
    %421 = vmatpush1.msra.mxu0 %v121
    %422 = vmatprep.subr.mxu0 0.0
    %423 = vmatpush1.msra.mxu0 %v120
    %424 = vmatprep.subr.mxu0 0.0
    %425 = vmatpush1.msra.mxu0 %v119
    %426 = vmatprep.subr.mxu0 0.0
    %427 = vmatpush1.msra.mxu0 %v118
    %428 = vmatprep.subr.mxu0 0.0
    %429 = vmatpush1.msra.mxu0 %v117
    %430 = vmatprep.subr.mxu0 0.0
    %431 = vmatpush1.msra.mxu0 %v116
    %432 = vmatprep.subr.mxu0 0.0
    %433 = vmatpush1.msra.mxu0 %v115
    %434 = vmatprep.subr.mxu0 0.0
    %435 = vmatpush1.msra.mxu0 %v114
    %436 = vmatprep.subr.mxu0 0.0
    %437 = vmatpush1.msra.mxu0 %v113
    %438 = vmatprep.subr.mxu0 0.0
    %439 = vmatpush2.msra.mxu0 %v144
    %440 = vmatprep.subr.mxu0 0.0
    %441 = vmatpush2.msra.mxu0 %v143
    %442 = vmatprep.subr.mxu0 0.0
    %443 = vmatpush2.msra.mxu0 %v142
    %444 = vmatprep.subr.mxu0 0.0
    %445 = vmatpush2.msra.mxu0 %v141
    %446 = vmatprep.subr.mxu0 0.0
    %447 = vmatpush2.msra.mxu0 %v140
    %448 = vmatprep.subr.mxu0 0.0
    %449 = vmatpush2.msra.mxu0 %v139
    %450 = vmatprep.subr.mxu0 0.0
    %451 = vmatpush2.msra.mxu0 %v138
    %452 = vmatprep.subr.mxu0 0.0
    %453 = vmatpush2.msra.mxu0 %v137
    %454 = vmatprep.subr.mxu0 0.0
    %455 = vmatpush2.msra.mxu0 %v136
    %456 = vmatprep.subr.mxu0 0.0
    %457 = vmatpush2.msra.mxu0 %v135
    %458 = vmatprep.subr.mxu0 0.0
    %459 = vmatpush2.msra.mxu0 %v134
    %460 = vmatprep.subr.mxu0 0.0
    %461 = vmatpush2.msra.mxu0 %v133
    %462 = vmatprep.subr.mxu0 0.0
    %463 = vmatpush2.msra.mxu0 %v132
    %464 = vmatprep.subr.mxu0 0.0
    %465 = vmatpush2.msra.mxu0 %v131
    %466 = vmatprep.subr.mxu0 0.0
    %467 = vmatpush2.msra.mxu0 %v130
    %468 = vmatprep.subr.mxu0 0.0
    %469 = vmatpush2.msra.mxu0 %v129
    %470 = vmatprep.mubr.f32.mxu0 %v187
    %471 = vmatmul.mubr.f32.gmra.mxu0 %v185
    %v472 = vpop.f32.mrf.mxu0
    %v473 = vadd.f32 %v403, %v472
    %v474 = vpop.f32.mrf.mxu0
    %475 = vdwg.mxu0
    %vm476 = vcmask 254976
    %477 = vst.msk [vmem:[#allocation2] sm:$0x3] %vm476, %v473
    // Predicated region
    $region14: #{normalization_forward.1} parent=1 // pred_check
      _
    $region15: #{normalization_forward.1} parent=1 // pred_check_branch
      %479 = sbr.rel (0) target = $region17
    $region16: #{normalization_forward.1} parent=1 // pred_region
      %s481 = ssub.s32 32, 32
      %482 = vsyncadd [#allocation3], %s481
      %s484 = sshll.u32 [#allocation2], 4
      %s485 = int_to_ptr.vmem [resolvable:$true] %s484
      %487 = dma.vmem_to_hbm [thread:$0]  %s485, 32, %s3, [#allocation3]
    $region17: #{normalization_forward.1} parent=1 // pred_fallthru
      _
    // Predicated region
    $region18: #{normalization_forward.1} parent=1 // pred_check
      _
    $region19: #{normalization_forward.1} parent=1 // pred_check_branch
      %489 = sbr.rel (0) target = $region21
    $region20: #{normalization_forward.1} parent=1 // pred_region
      %490 = dma.done [#allocation3], 32
    $region21: #{normalization_forward.1} parent=1 // pred_fallthru
      _
    %491 = vsyncpa [#allocation3], 1

</llo_original>
